<compile_context>
chip_gen: v7x
topology: tpu7x:2x2x1
jax: 0.10.0
libtpu: 0.0.40
codegen_flags: <defaults>
</compile_context>

<pallas_src>
import functools

import jax
import jax.numpy as jnp
from jax import lax
from jax.experimental import pallas as pl
from jax.experimental.pallas import tpu as pltpu


def _round_up(x, m):
    return ((x + m - 1) // m) * m


def _patch_proj_kernel(x_ref, w_ref, b_ref, o_ref, acc_ref):
    """One (tm, tn) output tile of X @ W + b, reduced over the K grid axis."""
    k = pl.program_id(2)

    @pl.when(k == 0)
    def _():
        acc_ref[...] = jnp.zeros_like(acc_ref)

    acc_ref[...] += jnp.dot(x_ref[...], w_ref[...],
                            preferred_element_type=jnp.float32)

    @pl.when(k == pl.num_programs(2) - 1)
    def _():
        o_ref[...] = (acc_ref[...] + b_ref[...]).astype(o_ref.dtype)


def patch_embedding(x, w_conv, b_conv, cls_token, *, patch_size,
                    use_bf16_matmul=True, allow_xla_input_fusion=True):
    """x: (B, C, H, W) NCHW. Returns (B, num_patches + 1, d_model)."""
    B, C, H, W = x.shape
    P = patch_size
    gh, gw = H // P, W // P
    num_patches = gh * gw
    d_model = w_conv.shape[0]
    K = C * P * P
    out_dtype = x.dtype

    # --- patchify glue: Conv2d(stride=P, kernel=P) == per-patch flatten ------
    # (B, C, gh, P, gw, P) -> (B, gh, gw, C, P, P) -> (B*num_patches, C*P*P)
    xp = x.reshape(B, C, gh, P, gw, P)
    xp = xp.transpose(0, 2, 4, 1, 3, 5)
    xp = xp.reshape(B * num_patches, K)

    # Conv weight (d_model, C, P, P) -> (K, d_model); same (c, kh, kw) order.
    w_flat = w_conv.reshape(d_model, K).T
    b_flat = b_conv.reshape(1, d_model).astype(jnp.float32)

    compute_dtype = jnp.bfloat16 if use_bf16_matmul else x.dtype
    xp = xp.astype(compute_dtype)
    w_flat = w_flat.astype(compute_dtype)

    # --- tiling --------------------------------------------------------------
    rows = B * num_patches
    tm = min(256, _round_up(rows, 8))            # 256-row tiles, sublane dense
    rows_pad = _round_up(rows, tm)

    d_pad = _round_up(d_model, 128)              # lane-dense output
    tn = 256 if (d_pad % 256 == 0 and d_pad > 128) else 128
    tn = min(tn, d_pad)

    if K > 2048:                                 # reduce K in MXU-sized strips
        tk = next((t for t in (512, 256, 128) if K % t == 0), K)
    else:
        tk = K

    if rows_pad != rows:
        xp = jnp.pad(xp, ((0, rows_pad - rows), (0, 0)))
    if d_pad != d_model:
        w_flat = jnp.pad(w_flat, ((0, 0), (0, d_pad - d_model)))
        b_flat = jnp.pad(b_flat, ((0, 0), (0, d_pad - d_model)))

    grid = (rows_pad // tm, d_pad // tn, K // tk)

    grid_spec = pltpu.PrefetchScalarGridSpec(
        num_scalar_prefetch=0,
        grid=grid,
        in_specs=[
            pl.BlockSpec((tm, tk), lambda i, j, k: (i, k)),
            pl.BlockSpec((tk, tn), lambda i, j, k: (k, j)),
            pl.BlockSpec((1, tn), lambda i, j, k: (0, j)),
        ],
        out_specs=pl.BlockSpec((tm, tn), lambda i, j, k: (i, j)),
        scratch_shapes=[pltpu.VMEM((tm, tn), jnp.float32)],
    )

    itemsize = jnp.dtype(compute_dtype).itemsize
    cost = pl.CostEstimate(
        flops=2 * rows_pad * K * d_pad,
        transcendentals=0,
        bytes_accessed=(rows_pad * K + K * d_pad) * itemsize
        + d_pad * 4
        + rows_pad * d_pad * jnp.dtype(out_dtype).itemsize,
    )

    compiler_params = pltpu.CompilerParams(
        dimension_semantics=("parallel", "parallel", "arbitrary"),
        vmem_limit_bytes=32 * 1024 * 1024,
        allow_input_fusion=(
            [True, False, False] if allow_xla_input_fusion else None),
    )

    proj = pl.pallas_call(
        _patch_proj_kernel,
        out_shape=jax.ShapeDtypeStruct((rows_pad, d_pad), out_dtype),
        grid_spec=grid_spec,
        compiler_params=compiler_params,
        cost_estimate=cost,
    )(xp, w_flat, b_flat)

    proj = proj[:rows, :d_model].reshape(B, num_patches, d_model)

    # cls-token prepend: tiny XLA concat, keeps the kernel's stores aligned.
    cls = jnp.broadcast_to(cls_token.reshape(1, 1, d_model).astype(out_dtype),
                           (B, 1, d_model))
    return jnp.concatenate([cls, proj], axis=1)


def _reference(x, w_conv, b_conv, cls_token, *, patch_size):
    """Pure-JAX reference mirroring the PyTorch forward (via a real conv)."""
    B = x.shape[0]
    d_model = w_conv.shape[0]
    y = lax.conv_general_dilated(
        x, w_conv,
        window_strides=(patch_size, patch_size),
        padding="VALID",
        dimension_numbers=("NCHW", "OIHW", "NCHW"),
    ) + b_conv.reshape(1, d_model, 1, 1)
    y = y.reshape(B, d_model, -1)          # flatten(2)
    y = jnp.transpose(y, (0, 2, 1))        # transpose(1, 2)
    cls = jnp.broadcast_to(cls_token, (B, 1, d_model))
    return jnp.concatenate([cls, y], axis=1)


if __name__ == "__main__":
    # Small, module-consistent shapes: image 16x16, patch 4, 4 channels, d_model 32.
    image_size, patch_size, in_channels, d_model = 16, 4, 4, 32
    B = 2

    key = jax.random.PRNGKey(0)
    kx, kw, kb, kc = jax.random.split(key, 4)

    x = jax.random.normal(kx, (B, in_channels, image_size, image_size),
                          dtype=jnp.float32)
    w_conv = 0.1 * jax.random.normal(
        kw, (d_model, in_channels, patch_size, patch_size), dtype=jnp.float32)
    b_conv = 0.1 * jax.random.normal(kb, (d_model,), dtype=jnp.float32)
    cls_token = jax.random.normal(kc, (1, 1, d_model), dtype=jnp.float32)

    def build(allow_fusion):
        return jax.jit(functools.partial(
            patch_embedding, patch_size=patch_size,
            allow_xla_input_fusion=allow_fusion))

    try:
        out = jax.block_until_ready(build(True)(x, w_conv, b_conv, cls_token))
    except Exception:
        # Fallback if this JAX/XLA build rejects fusing the patchify producer
        # into the Mosaic custom call; kernel itself is unchanged.
        out = jax.block_until_ready(build(False)(x, w_conv, b_conv, cls_token))

    ref = _reference(x, w_conv, b_conv, cls_token, patch_size=patch_size)
    assert out.shape == (B, (image_size // patch_size) ** 2 + 1, d_model)
    # bf16 MXU operands (f32 accumulation) vs. the f32 conv reference.
    assert jnp.allclose(out, ref, atol=5e-2, rtol=5e-2), \
        float(jnp.max(jnp.abs(out - ref)))
    print("KERNEL_OK")
</pallas_src>

<mosaic_0001>
module attributes {stable_mosaic.version = 11 : i64} {
  func.func @_patch_proj_kernel(%arg0: i32, %arg1: i32, %arg2: i32, %arg3: memref<32x64xbf16, #tpu.memory_space<vmem>>, %arg4: memref<64x128xbf16, #tpu.memory_space<vmem>>, %arg5: memref<1x128xf32, #tpu.memory_space<vmem>>, %arg6: memref<32x128xf32, #tpu.memory_space<vmem>>, %arg7: memref<32x128xf32, #tpu.memory_space<vmem>>) attributes {dimension_semantics = [#tpu.dimension_semantics<parallel>, #tpu.dimension_semantics<parallel>, #tpu.dimension_semantics<arbitrary>], iteration_bounds = array<i64: 1, 1, 1>, scalar_prefetch = 0 : i64, scratch_operands = 1 : i64, tpu.core_type = #tpu.core_type<tc>, window_params = [{transform_indices = @transform_0, window_bounds = array<i64: 32, 64>}, {transform_indices = @transform_1, window_bounds = array<i64: 64, 128>}, {transform_indices = @transform_2, window_bounds = array<i64: 1, 128>}, {transform_indices = @transform_3, window_bounds = array<i64: 32, 128>}]} {
    %c0_i32 = arith.constant 0 : i32
    %0 = arith.cmpi eq, %arg2, %c0_i32 : i32
    %1 = arith.extui %0 : i1 to i32
    %c0_i32_0 = arith.constant 0 : i32
    %2 = arith.cmpi ne, %1, %c0_i32_0 : i32
    scf.if %2 {
      %cst_10 = arith.constant 0.000000e+00 : f32
      %12 = vector.broadcast %cst_10 : f32 to vector<32x128xf32>
      %c0_11 = arith.constant 0 : index
      %c0_12 = arith.constant 0 : index
      %13 = vector.load %arg7[%c0_11, %c0_12] : memref<32x128xf32, #tpu.memory_space<vmem>>, vector<32x128xf32>
      tpu.vector_store %arg7[%c0_11, %c0_12], %12 {strides = array<i32>} : memref<32x128xf32, #tpu.memory_space<vmem>>, vector<32x128xf32>,
    } else {
    }
    %c0 = arith.constant 0 : index
    %c0_1 = arith.constant 0 : index
    %3 = vector.load %arg7[%c0, %c0_1] : memref<32x128xf32, #tpu.memory_space<vmem>>, vector<32x128xf32>
    %c0_2 = arith.constant 0 : index
    %c0_3 = arith.constant 0 : index
    %4 = vector.load %arg3[%c0_2, %c0_3] : memref<32x64xbf16, #tpu.memory_space<vmem>>, vector<32x64xbf16>
    %c0_4 = arith.constant 0 : index
    %c0_5 = arith.constant 0 : index
    %5 = vector.load %arg4[%c0_4, %c0_5] : memref<64x128xbf16, #tpu.memory_space<vmem>>, vector<64x128xbf16>
    %cst = arith.constant dense<0.000000e+00> : vector<32x128xf32>
    %6 = tpu.matmul %4, %5, %cst {dimension_numbers = #tpu.dot_dimension_numbers<[1], [0], [0], [1], [0, 0, 1, 1], [], []>} : vector<32x64xbf16>, vector<64x128xbf16>, vector<32x128xf32> -> vector<32x128xf32>
    %7 = arith.addf %3, %6 : vector<32x128xf32>
    %c0_6 = arith.constant 0 : index
    %c0_7 = arith.constant 0 : index
    %8 = vector.load %arg7[%c0_6, %c0_7] : memref<32x128xf32, #tpu.memory_space<vmem>>, vector<32x128xf32>
    tpu.vector_store %arg7[%c0_6, %c0_7], %7 {strides = array<i32>} : memref<32x128xf32, #tpu.memory_space<vmem>>, vector<32x128xf32>,
    %c0_i32_8 = arith.constant 0 : i32
    %9 = arith.cmpi eq, %arg2, %c0_i32_8 : i32
    %10 = arith.extui %9 : i1 to i32
    %c0_i32_9 = arith.constant 0 : i32
    %11 = arith.cmpi ne, %10, %c0_i32_9 : i32
    scf.if %11 {
      %c0_10 = arith.constant 0 : index
      %c0_11 = arith.constant 0 : index
      %12 = vector.load %arg7[%c0_10, %c0_11] : memref<32x128xf32, #tpu.memory_space<vmem>>, vector<32x128xf32>
      %c0_12 = arith.constant 0 : index
      %c0_13 = arith.constant 0 : index
      %13 = vector.load %arg5[%c0_12, %c0_13] : memref<1x128xf32, #tpu.memory_space<vmem>>, vector<1x128xf32>
      %14 = vector.broadcast %13 : vector<1x128xf32> to vector<32x128xf32>
      %15 = arith.addf %12, %14 : vector<32x128xf32>
      %c0_14 = arith.constant 0 : index
      %c0_15 = arith.constant 0 : index
      %16 = vector.load %arg6[%c0_14, %c0_15] : memref<32x128xf32, #tpu.memory_space<vmem>>, vector<32x128xf32>
      tpu.vector_store %arg6[%c0_14, %c0_15], %15 {strides = array<i32>} : memref<32x128xf32, #tpu.memory_space<vmem>>, vector<32x128xf32>,
    } else {
    }
    return
  }
  func.func @transform_0(%arg0: i32, %arg1: i32, %arg2: i32) -> (i32, i32) {
    %c0_i32 = arith.constant 0 : i32
    return %arg0, %arg2 : i32, i32
  }
  func.func @transform_1(%arg0: i32, %arg1: i32, %arg2: i32) -> (i32, i32) {
    %c0_i32 = arith.constant 0 : i32
    return %arg2, %arg1 : i32, i32
  }
  func.func @transform_2(%arg0: i32, %arg1: i32, %arg2: i32) -> (i32, i32) {
    %c0_i32 = arith.constant 0 : i32
    %c0_i32_0 = arith.constant 0 : i32
    return %c0_i32, %arg1 : i32, i32
  }
  func.func @transform_3(%arg0: i32, %arg1: i32, %arg2: i32) -> (i32, i32) {
    %c0_i32 = arith.constant 0 : i32
    return %arg0, %arg1 : i32, i32
  }
}

module attributes {stable_mosaic.version = 11 : i64} {
  func.func @_patch_proj_kernel(%arg0: i32, %arg1: i32, %arg2: i32, %arg3: memref<32x64xbf16, #tpu.memory_space<vmem>>, %arg4: memref<64x128xbf16, #tpu.memory_space<vmem>>, %arg5: memref<1x128xf32, #tpu.memory_space<vmem>>, %arg6: memref<32x128xf32, #tpu.memory_space<vmem>>, %arg7: memref<32x128xf32, #tpu.memory_space<vmem>>) attributes {dimension_semantics = [#tpu.dimension_semantics<parallel>, #tpu.dimension_semantics<parallel>, #tpu.dimension_semantics<arbitrary>], iteration_bounds = array<i64: 1, 1, 1>, scalar_prefetch = 0 : i64, scratch_operands = 1 : i64, tpu.core_type = #tpu.core_type<tc>, window_params = [{transform_indices = @transform_0, window_bounds = array<i64: 32, 64>}, {transform_indices = @transform_1, window_bounds = array<i64: 64, 128>}, {transform_indices = @transform_2, window_bounds = array<i64: 1, 128>}, {transform_indices = @transform_3, window_bounds = array<i64: 32, 128>}]} {
    %c0_i32 = arith.constant 0 : i32
    %0 = arith.cmpi eq, %arg2, %c0_i32 : i32
    %1 = arith.extui %0 : i1 to i32
    %c0_i32_0 = arith.constant 0 : i32
    %2 = arith.cmpi ne, %1, %c0_i32_0 : i32
    scf.if %2 {
      %cst_10 = arith.constant 0.000000e+00 : f32
      %12 = vector.broadcast %cst_10 : f32 to vector<32x128xf32>
      %c0_11 = arith.constant 0 : index
      %c0_12 = arith.constant 0 : index
      %13 = vector.load %arg7[%c0_11, %c0_12] : memref<32x128xf32, #tpu.memory_space<vmem>>, vector<32x128xf32>
      tpu.vector_store %arg7[%c0_11, %c0_12], %12 {strides = array<i32>} : memref<32x128xf32, #tpu.memory_space<vmem>>, vector<32x128xf32>,
    } else {
    }
    %c0 = arith.constant 0 : index
    %c0_1 = arith.constant 0 : index
    %3 = vector.load %arg7[%c0, %c0_1] : memref<32x128xf32, #tpu.memory_space<vmem>>, vector<32x128xf32>
    %c0_2 = arith.constant 0 : index
    %c0_3 = arith.constant 0 : index
    %4 = vector.load %arg3[%c0_2, %c0_3] : memref<32x64xbf16, #tpu.memory_space<vmem>>, vector<32x64xbf16>
    %c0_4 = arith.constant 0 : index
    %c0_5 = arith.constant 0 : index
    %5 = vector.load %arg4[%c0_4, %c0_5] : memref<64x128xbf16, #tpu.memory_space<vmem>>, vector<64x128xbf16>
    %cst = arith.constant dense<0.000000e+00> : vector<32x128xf32>
    %6 = tpu.matmul %4, %5, %cst {dimension_numbers = #tpu.dot_dimension_numbers<[1], [0], [0], [1], [0, 0, 1, 1], [], []>} : vector<32x64xbf16>, vector<64x128xbf16>, vector<32x128xf32> -> vector<32x128xf32>
    %7 = arith.addf %3, %6 : vector<32x128xf32>
    %c0_6 = arith.constant 0 : index
    %c0_7 = arith.constant 0 : index
    %8 = vector.load %arg7[%c0_6, %c0_7] : memref<32x128xf32, #tpu.memory_space<vmem>>, vector<32x128xf32>
    tpu.vector_store %arg7[%c0_6, %c0_7], %7 {strides = array<i32>} : memref<32x128xf32, #tpu.memory_space<vmem>>, vector<32x128xf32>,
    %c0_i32_8 = arith.constant 0 : i32
    %9 = arith.cmpi eq, %arg2, %c0_i32_8 : i32
    %10 = arith.extui %9 : i1 to i32
    %c0_i32_9 = arith.constant 0 : i32
    %11 = arith.cmpi ne, %10, %c0_i32_9 : i32
    scf.if %11 {
      %c0_10 = arith.constant 0 : index
      %c0_11 = arith.constant 0 : index
      %12 = vector.load %arg7[%c0_10, %c0_11] : memref<32x128xf32, #tpu.memory_space<vmem>>, vector<32x128xf32>
      %c0_12 = arith.constant 0 : index
      %c0_13 = arith.constant 0 : index
      %13 = vector.load %arg5[%c0_12, %c0_13] : memref<1x128xf32, #tpu.memory_space<vmem>>, vector<1x128xf32>
      %14 = vector.broadcast %13 : vector<1x128xf32> to vector<32x128xf32>
      %15 = arith.addf %12, %14 : vector<32x128xf32>
      %c0_14 = arith.constant 0 : index
      %c0_15 = arith.constant 0 : index
      %16 = vector.load %arg6[%c0_14, %c0_15] : memref<32x128xf32, #tpu.memory_space<vmem>>, vector<32x128xf32>
      tpu.vector_store %arg6[%c0_14, %c0_15], %15 {strides = array<i32>} : memref<32x128xf32, #tpu.memory_space<vmem>>, vector<32x128xf32>,
    } else {
    }
    return
  }
  func.func @transform_0(%arg0: i32, %arg1: i32, %arg2: i32) -> (i32, i32) {
    %c0_i32 = arith.constant 0 : i32
    return %arg0, %arg2 : i32, i32
  }
  func.func @transform_1(%arg0: i32, %arg1: i32, %arg2: i32) -> (i32, i32) {
    %c0_i32 = arith.constant 0 : i32
    return %arg2, %arg1 : i32, i32
  }
  func.func @transform_2(%arg0: i32, %arg1: i32, %arg2: i32) -> (i32, i32) {
    %c0_i32 = arith.constant 0 : i32
    %c0_i32_0 = arith.constant 0 : i32
    return %c0_i32, %arg1 : i32, i32
  }
  func.func @transform_3(%arg0: i32, %arg1: i32, %arg2: i32) -> (i32, i32) {
    %c0_i32 = arith.constant 0 : i32
    return %arg0, %arg1 : i32, i32
  }
}

</mosaic_0001>

<llo_original>
// kernel: patch_embedding.1
$region0: #{patch_embedding.1}
  #allocation0 [shape = 'u32[]', space=smem, size = 0x4, offset = 0x4, fixed_abs, tag = 'smem constant byte address 0x4 - core index']
  #allocation1 [shape = 'u32[144,128]{1,0:T(1,128)}', space=vmem, size = 0x12000, scoped, tag = 'internal scratch']
  #allocation2 [shape = 'f32[32,128]{1,0:T(8,128)}', space=vmem, size = 0x4000, scoped, tag = 'scratch operand']
  %s0 = inlined_call_operand.vmem [shape: bf16[32,64], index: 0, kind: input, shape index: {}]
  %s1 = inlined_call_operand.vmem [shape: bf16[64,128], index: 1, kind: input, shape index: {}]
  %s2 = inlined_call_operand.vmem [shape: f32[1,128], index: 2, kind: input, shape index: {}]
  %s3 = inlined_call_operand.vmem [shape: f32[32,128], index: 3, kind: output, shape index: {}]
  %s4 = sld [smem:[#allocation0]]
  $region30: #{patch_embedding.1} parent=0
    _
  %s6 = ssub.s32 1, %s4
  %s7 = scalar_select 0, %s6, %s4
  // Predicated region
  $region2: #{patch_embedding.1} parent=0 // pred_check
    _
  $region3: #{patch_embedding.1} parent=0 // pred_check_branch
    %9 = sbr.rel (0) target = $region5
  $region4: #{patch_embedding.1} parent=0 // pred_region
    _
  $region5: #{patch_embedding.1} parent=0 // pred_fallthru
    _
  // Predicated region
  $region6: #{patch_embedding.1} parent=0 // pred_check
    _
  $region7: #{patch_embedding.1} parent=0 // pred_check_branch
    %11 = sbr.rel (0) target = $region9
  $region8: #{patch_embedding.1} parent=0 // pred_region
    _
  $region9: #{patch_embedding.1} parent=0 // pred_fallthru
    _
  // Predicated region
  $region10: #{patch_embedding.1} parent=0 // pred_check
    _
  $region11: #{patch_embedding.1} parent=0 // pred_check_branch
    %13 = sbr.rel (0) target = $region13
  $region12: #{patch_embedding.1} parent=0 // pred_region
    _
  $region13: #{patch_embedding.1} parent=0 // pred_fallthru
    _
  %p15 = scmp.eq.s32.totalorder 0, 0
  // Predicated region
  $region14: #{patch_embedding.1} parent=0 // pred_check
    %p16 = pneg %p15
  $region15: #{patch_embedding.1} parent=0 // pred_check_branch
    %18 = sbr.rel (%p16) target = $region17
  $region16: #{patch_embedding.1} parent=0 // pred_region
    %19 = vst [vmem:[#allocation2] sm:$0xff] 0.0
    %20 = vst [vmem:[#allocation2 + $0x8] sm:$0xff] 0.0
    %21 = vst [vmem:[#allocation2 + $0x10] sm:$0xff] 0.0
    %22 = vst [vmem:[#allocation2 + $0x18] sm:$0xff] 0.0
  $region17: #{patch_embedding.1} parent=0 // pred_fallthru
    _
  %v23 = vld [vmem:[#allocation2] sm:$0xff]
  %v24 = vld [vmem:[#allocation2 + $0x8] sm:$0xff]
  %v25 = vld [vmem:[#allocation2 + $0x10] sm:$0xff]
  %v26 = vld [vmem:[#allocation2 + $0x18] sm:$0xff]
  %v27 = vld [vmem:[%s0] sm:$0xf]
  %v28 = vld [vmem:[%s0 + $0x4] sm:$0xf]
  %v29 = vld [vmem:[%s0 + $0x8] sm:$0xf]
  %v30 = vld [vmem:[%s0 + $0xc] sm:$0xf]
  %v31 = vld [vmem:[%s1] sm:$0xf]
  %v32 = vld [vmem:[%s1 + $0x4] sm:$0xf]
  %v33 = vld [vmem:[%s1 + $0x8] sm:$0xf]
  %v34 = vld [vmem:[%s1 + $0xc] sm:$0xf]
  %v35 = vld [vmem:[%s1 + $0x10] sm:$0xf]
  %v36 = vld [vmem:[%s1 + $0x14] sm:$0xf]
  %v37 = vld [vmem:[%s1 + $0x18] sm:$0xf]
  %v38 = vld [vmem:[%s1 + $0x1c] sm:$0xf]
  %v43 = vunpack.c.l.b16 %v27
  %v44 = vunpack.c.l.b16 %v28
  %v45 = vunpack.c.l.b16 %v29
  %v46 = vunpack.c.l.b16 %v30
  %v47 = vpack.c.b16 %v44, %v43
  %v48 = vpack.c.b16 %v46, %v45
  %v57 = vunpack.c.l.b16 %v31
  %v58 = vunpack.c.l.b16 %v32
  %v59 = vunpack.c.l.b16 %v33
  %v60 = vunpack.c.l.b16 %v34
  %v61 = vunpack.c.l.b16 %v35
  %v62 = vunpack.c.l.b16 %v36
  %v63 = vunpack.c.l.b16 %v37
  %v64 = vunpack.c.l.b16 %v38
  %v65 = vpack.c.b16 %v58, %v57
  %v66 = vpack.c.b16 %v60, %v59
  %v67 = vpack.c.b16 %v62, %v61
  %v68 = vpack.c.b16 %v64, %v63
  %vm73 = vcmask 523264
  %v75 = vsel %vm73, %v47, 0
  %v78 = vsel %vm73, %v48, 0
  %80 = vmatprep.subr.bf16.mxu0 0
  %81 = vmatpush1.bf16.msra.mxu0 %v65
  %82 = vmatprep.subr.bf16.mxu0 0
  %83 = vmatpush1.bf16.msra.mxu0 %v66
  %84 = vmatprep.subr.bf16.mxu0 0
  %85 = vmatpush1.bf16.msra.mxu0 %v67
  %86 = vmatprep.subr.bf16.mxu0 0
  %87 = vmatpush1.bf16.msra.mxu0 %v68
  %88 = vmatprep.subr.bf16.mxu0 0
  %89 = vmatpush1.bf16.msra.mxu0 0
  %90 = vmatprep.subr.bf16.mxu0 0
  %91 = vmatpush1.bf16.msra.mxu0 0
  %92 = vmatprep.subr.bf16.mxu0 0
  %93 = vmatpush1.bf16.msra.mxu0 0
  %94 = vmatprep.subr.bf16.mxu0 0
  %95 = vmatpush1.bf16.msra.mxu0 0
  %96 = vmatprep.subr.bf16.mxu0 0
  %97 = vmatpush1.bf16.msra.mxu0 0
  %98 = vmatprep.subr.bf16.mxu0 0
  %99 = vmatpush1.bf16.msra.mxu0 0
  %100 = vmatprep.subr.bf16.mxu0 0
  %101 = vmatpush1.bf16.msra.mxu0 0
  %102 = vmatprep.subr.bf16.mxu0 0
  %103 = vmatpush1.bf16.msra.mxu0 0
  %104 = vmatprep.subr.bf16.mxu0 0
  %105 = vmatpush1.bf16.msra.mxu0 0
  %106 = vmatprep.subr.bf16.mxu0 0
  %107 = vmatpush1.bf16.msra.mxu0 0
  %108 = vmatprep.subr.bf16.mxu0 0
  %109 = vmatpush1.bf16.msra.mxu0 0
  %110 = vmatprep.subr.bf16.mxu0 0
  %111 = vmatpush1.bf16.msra.mxu0 0
  %112 = vmatprep.mubr.bf16.mxu0 0
  %113 = vmatmul.mubr.bf16.gmra.mrb[0].mxu0 %v75
  %v114 = vpop.f32.mrb[0].mxu0
  %v115 = vadd.f32 0.0, %v114
  %v116 = vpop.f32.mrb[0].mxu0
  %v117 = vpop.f32.mrb[0].mxu0
  %v118 = vadd.f32 0.0, %v117
  %v119 = vpop.f32.mrb[0].mxu0
  %120 = vmatprep.mubr.bf16.mxu0 0
  %121 = vmatmul.mubr.bf16.gmra.mrb[0].mxu0 %v78
  %v122 = vpop.f32.mrb[0].mxu0
  %v123 = vadd.f32 0.0, %v122
  %v124 = vpop.f32.mrb[0].mxu0
  %v125 = vpop.f32.mrb[0].mxu0
  %v126 = vadd.f32 0.0, %v125
  %v127 = vpop.f32.mrb[0].mxu0
  %128 = vdwg.mxu0
  %v129 = vadd.f32 %v23, %v115
  %v130 = vadd.f32 %v24, %v118
  %v131 = vadd.f32 %v25, %v123
  %v132 = vadd.f32 %v26, %v126
  %133 = vst [vmem:[#allocation2] sm:$0xff] %v129
  %134 = vst [vmem:[#allocation2 + $0x8] sm:$0xff] %v130
  %135 = vst [vmem:[#allocation2 + $0x10] sm:$0xff] %v131
  %136 = vst [vmem:[#allocation2 + $0x18] sm:$0xff] %v132
  // Predicated region
  $region18: #{patch_embedding.1} parent=0 // pred_check
    %p137 = pneg %p15
  $region19: #{patch_embedding.1} parent=0 // pred_check_branch
    %139 = sbr.rel (%p137) target = $region21
  $region20: #{patch_embedding.1} parent=0 // pred_region
    %v140 = vld [vmem:[#allocation2] sm:$0xff]
    %v141 = vld [vmem:[#allocation2 + $0x8] sm:$0xff]
    %v142 = vld [vmem:[#allocation2 + $0x10] sm:$0xff]
    %v143 = vld [vmem:[#allocation2 + $0x18] sm:$0xff]
    %v144 = vld [vmem:[%s2] sm:$0x1]
    %v146 = vlaneseq
    %v147 = vshrl.u32 %v146, 7
    %v148 = vsub.s32 0, %v147
    %v149 = vrot.slane %v144, %v148
    %v151 = vadd.f32 %v140, %v149
    %v152 = vadd.f32 %v141, %v149
    %v153 = vadd.f32 %v142, %v149
    %v154 = vadd.f32 %v143, %v149
    %155 = vst [vmem:[%s3] sm:$0xff] %v151
    %156 = vst [vmem:[%s3 + $0x8] sm:$0xff] %v152
    %157 = vst [vmem:[%s3 + $0x10] sm:$0xff] %v153
    %158 = vst [vmem:[%s3 + $0x18] sm:$0xff] %v154
  $region21: #{patch_embedding.1} parent=0 // pred_fallthru
    _
  // Predicated region
  $region22: #{patch_embedding.1} parent=0 // pred_check
    _
  $region23: #{patch_embedding.1} parent=0 // pred_check_branch
    %160 = sbr.rel (0) target = $region25
  $region24: #{patch_embedding.1} parent=0 // pred_region
    _
  $region25: #{patch_embedding.1} parent=0 // pred_fallthru
    _
  // Predicated region
  $region26: #{patch_embedding.1} parent=0 // pred_check
    _
  $region27: #{patch_embedding.1} parent=0 // pred_check_branch
    %162 = sbr.rel (0) target = $region29
  $region28: #{patch_embedding.1} parent=0 // pred_region
    _
  $region29: #{patch_embedding.1} parent=0 // pred_fallthru
    _

// kernel: patch_embedding.1
$region0: #{patch_embedding.1}
  #allocation0 [shape = 'u32[]', space=smem, size = 0x4, offset = 0x4, fixed_abs, tag = 'smem constant byte address 0x4 - core index']
  #allocation1 [shape = 'u32[144,128]{1,0:T(1,128)}', space=vmem, size = 0x12000, scoped, tag = 'internal scratch']
  #allocation2 [shape = 'f32[32,128]{1,0:T(8,128)}', space=vmem, size = 0x4000, scoped, tag = 'scratch operand']
  %s0 = inlined_call_operand.vmem [shape: bf16[32,64], index: 0, kind: input, shape index: {}]
  %s1 = inlined_call_operand.vmem [shape: bf16[64,128], index: 1, kind: input, shape index: {}]
  %s2 = inlined_call_operand.vmem [shape: f32[1,128], index: 2, kind: input, shape index: {}]
  %s3 = inlined_call_operand.vmem [shape: f32[32,128], index: 3, kind: output, shape index: {}]
  %s4 = sld [smem:[#allocation0]]
  $region30: #{patch_embedding.1} parent=0
    _
  %s6 = ssub.s32 1, %s4
  %s7 = scalar_select 0, %s6, %s4
  // Predicated region
  $region2: #{patch_embedding.1} parent=0 // pred_check
    _
  $region3: #{patch_embedding.1} parent=0 // pred_check_branch
    %9 = sbr.rel (0) target = $region5
  $region4: #{patch_embedding.1} parent=0 // pred_region
    _
  $region5: #{patch_embedding.1} parent=0 // pred_fallthru
    _
  // Predicated region
  $region6: #{patch_embedding.1} parent=0 // pred_check
    _
  $region7: #{patch_embedding.1} parent=0 // pred_check_branch
    %11 = sbr.rel (0) target = $region9
  $region8: #{patch_embedding.1} parent=0 // pred_region
    _
  $region9: #{patch_embedding.1} parent=0 // pred_fallthru
    _
  // Predicated region
  $region10: #{patch_embedding.1} parent=0 // pred_check
    _
  $region11: #{patch_embedding.1} parent=0 // pred_check_branch
    %13 = sbr.rel (0) target = $region13
  $region12: #{patch_embedding.1} parent=0 // pred_region
    _
  $region13: #{patch_embedding.1} parent=0 // pred_fallthru
    _
  %p15 = scmp.eq.s32.totalorder 0, 0
  // Predicated region
  $region14: #{patch_embedding.1} parent=0 // pred_check
    %p16 = pneg %p15
  $region15: #{patch_embedding.1} parent=0 // pred_check_branch
    %18 = sbr.rel (%p16) target = $region17
  $region16: #{patch_embedding.1} parent=0 // pred_region
    %19 = vst [vmem:[#allocation2] sm:$0xff] 0.0
    %20 = vst [vmem:[#allocation2 + $0x8] sm:$0xff] 0.0
    %21 = vst [vmem:[#allocation2 + $0x10] sm:$0xff] 0.0
    %22 = vst [vmem:[#allocation2 + $0x18] sm:$0xff] 0.0
  $region17: #{patch_embedding.1} parent=0 // pred_fallthru
    _
  %v23 = vld [vmem:[#allocation2] sm:$0xff]
  %v24 = vld [vmem:[#allocation2 + $0x8] sm:$0xff]
  %v25 = vld [vmem:[#allocation2 + $0x10] sm:$0xff]
  %v26 = vld [vmem:[#allocation2 + $0x18] sm:$0xff]
  %v27 = vld [vmem:[%s0] sm:$0xf]
  %v28 = vld [vmem:[%s0 + $0x4] sm:$0xf]
  %v29 = vld [vmem:[%s0 + $0x8] sm:$0xf]
  %v30 = vld [vmem:[%s0 + $0xc] sm:$0xf]
  %v31 = vld [vmem:[%s1] sm:$0xf]
  %v32 = vld [vmem:[%s1 + $0x4] sm:$0xf]
  %v33 = vld [vmem:[%s1 + $0x8] sm:$0xf]
  %v34 = vld [vmem:[%s1 + $0xc] sm:$0xf]
  %v35 = vld [vmem:[%s1 + $0x10] sm:$0xf]
  %v36 = vld [vmem:[%s1 + $0x14] sm:$0xf]
  %v37 = vld [vmem:[%s1 + $0x18] sm:$0xf]
  %v38 = vld [vmem:[%s1 + $0x1c] sm:$0xf]
  %v43 = vunpack.c.l.b16 %v27
  %v44 = vunpack.c.l.b16 %v28
  %v45 = vunpack.c.l.b16 %v29
  %v46 = vunpack.c.l.b16 %v30
  %v47 = vpack.c.b16 %v44, %v43
  %v48 = vpack.c.b16 %v46, %v45
  %v57 = vunpack.c.l.b16 %v31
  %v58 = vunpack.c.l.b16 %v32
  %v59 = vunpack.c.l.b16 %v33
  %v60 = vunpack.c.l.b16 %v34
  %v61 = vunpack.c.l.b16 %v35
  %v62 = vunpack.c.l.b16 %v36
  %v63 = vunpack.c.l.b16 %v37
  %v64 = vunpack.c.l.b16 %v38
  %v65 = vpack.c.b16 %v58, %v57
  %v66 = vpack.c.b16 %v60, %v59
  %v67 = vpack.c.b16 %v62, %v61
  %v68 = vpack.c.b16 %v64, %v63
  %vm73 = vcmask 523264
  %v75 = vsel %vm73, %v47, 0
  %v78 = vsel %vm73, %v48, 0
  %80 = vmatprep.subr.bf16.mxu0 0
  %81 = vmatpush1.bf16.msra.mxu0 %v65
  %82 = vmatprep.subr.bf16.mxu0 0
  %83 = vmatpush1.bf16.msra.mxu0 %v66
  %84 = vmatprep.subr.bf16.mxu0 0
  %85 = vmatpush1.bf16.msra.mxu0 %v67
  %86 = vmatprep.subr.bf16.mxu0 0
  %87 = vmatpush1.bf16.msra.mxu0 %v68
  %88 = vmatprep.subr.bf16.mxu0 0
  %89 = vmatpush1.bf16.msra.mxu0 0
  %90 = vmatprep.subr.bf16.mxu0 0
  %91 = vmatpush1.bf16.msra.mxu0 0
  %92 = vmatprep.subr.bf16.mxu0 0
  %93 = vmatpush1.bf16.msra.mxu0 0
  %94 = vmatprep.subr.bf16.mxu0 0
  %95 = vmatpush1.bf16.msra.mxu0 0
  %96 = vmatprep.subr.bf16.mxu0 0
  %97 = vmatpush1.bf16.msra.mxu0 0
  %98 = vmatprep.subr.bf16.mxu0 0
  %99 = vmatpush1.bf16.msra.mxu0 0
  %100 = vmatprep.subr.bf16.mxu0 0
  %101 = vmatpush1.bf16.msra.mxu0 0
  %102 = vmatprep.subr.bf16.mxu0 0
  %103 = vmatpush1.bf16.msra.mxu0 0
  %104 = vmatprep.subr.bf16.mxu0 0
  %105 = vmatpush1.bf16.msra.mxu0 0
  %106 = vmatprep.subr.bf16.mxu0 0
  %107 = vmatpush1.bf16.msra.mxu0 0
  %108 = vmatprep.subr.bf16.mxu0 0
  %109 = vmatpush1.bf16.msra.mxu0 0
  %110 = vmatprep.subr.bf16.mxu0 0
  %111 = vmatpush1.bf16.msra.mxu0 0
  %112 = vmatprep.mubr.bf16.mxu0 0
  %113 = vmatmul.mubr.bf16.gmra.mrb[0].mxu0 %v75
  %v114 = vpop.f32.mrb[0].mxu0
  %v115 = vadd.f32 0.0, %v114
  %v116 = vpop.f32.mrb[0].mxu0
  %v117 = vpop.f32.mrb[0].mxu0
  %v118 = vadd.f32 0.0, %v117
  %v119 = vpop.f32.mrb[0].mxu0
  %120 = vmatprep.mubr.bf16.mxu0 0
  %121 = vmatmul.mubr.bf16.gmra.mrb[0].mxu0 %v78
  %v122 = vpop.f32.mrb[0].mxu0
  %v123 = vadd.f32 0.0, %v122
  %v124 = vpop.f32.mrb[0].mxu0
  %v125 = vpop.f32.mrb[0].mxu0
  %v126 = vadd.f32 0.0, %v125
  %v127 = vpop.f32.mrb[0].mxu0
  %128 = vdwg.mxu0
  %v129 = vadd.f32 %v23, %v115
  %v130 = vadd.f32 %v24, %v118
  %v131 = vadd.f32 %v25, %v123
  %v132 = vadd.f32 %v26, %v126
  %133 = vst [vmem:[#allocation2] sm:$0xff] %v129
  %134 = vst [vmem:[#allocation2 + $0x8] sm:$0xff] %v130
  %135 = vst [vmem:[#allocation2 + $0x10] sm:$0xff] %v131
  %136 = vst [vmem:[#allocation2 + $0x18] sm:$0xff] %v132
  // Predicated region
  $region18: #{patch_embedding.1} parent=0 // pred_check
    %p137 = pneg %p15
  $region19: #{patch_embedding.1} parent=0 // pred_check_branch
    %139 = sbr.rel (%p137) target = $region21
  $region20: #{patch_embedding.1} parent=0 // pred_region
    %v140 = vld [vmem:[#allocation2] sm:$0xff]
    %v141 = vld [vmem:[#allocation2 + $0x8] sm:$0xff]
    %v142 = vld [vmem:[#allocation2 + $0x10] sm:$0xff]
    %v143 = vld [vmem:[#allocation2 + $0x18] sm:$0xff]
    %v144 = vld [vmem:[%s2] sm:$0x1]
    %v146 = vlaneseq
    %v147 = vshrl.u32 %v146, 7
    %v148 = vsub.s32 0, %v147
    %v149 = vrot.slane %v144, %v148
    %v151 = vadd.f32 %v140, %v149
    %v152 = vadd.f32 %v141, %v149
    %v153 = vadd.f32 %v142, %v149
    %v154 = vadd.f32 %v143, %v149
    %155 = vst [vmem:[%s3] sm:$0xff] %v151
    %156 = vst [vmem:[%s3 + $0x8] sm:$0xff] %v152
    %157 = vst [vmem:[%s3 + $0x10] sm:$0xff] %v153
    %158 = vst [vmem:[%s3 + $0x18] sm:$0xff] %v154
  $region21: #{patch_embedding.1} parent=0 // pred_fallthru
    _
  // Predicated region
  $region22: #{patch_embedding.1} parent=0 // pred_check
    _
  $region23: #{patch_embedding.1} parent=0 // pred_check_branch
    %160 = sbr.rel (0) target = $region25
  $region24: #{patch_embedding.1} parent=0 // pred_region
    _
  $region25: #{patch_embedding.1} parent=0 // pred_fallthru
    _
  // Predicated region
  $region26: #{patch_embedding.1} parent=0 // pred_check
    _
  $region27: #{patch_embedding.1} parent=0 // pred_check_branch
    %162 = sbr.rel (0) target = $region29
  $region28: #{patch_embedding.1} parent=0 // pred_region
    _
  $region29: #{patch_embedding.1} parent=0 // pred_fallthru
    _

</llo_original>
